<compile_context>
chip_gen: v7x
topology: tpu7x:2x2x1
jax: 0.10.0
libtpu: 0.0.40
codegen_flags: <defaults>
</compile_context>

<pallas_src>
import functools
import math

import jax
import jax.numpy as jnp
from jax import lax
from jax.experimental import pallas as pl
from jax.experimental.pallas import tpu as pltpu


# Explicit scoped-VMEM budget: above v5e's 16 MiB default, and <= ~48 MiB so a
# v7x (64 MiB physical) still has headroom for the runtime.
VMEM_LIMIT_BYTES = 48 * 1024 * 1024


# ----------------------------------------------------------------------------
# Fused Linear + LayerNorm kernels
# ----------------------------------------------------------------------------
def _linear_layernorm_kernel(x_ref, w_ref, b_ref, g_ref, beta_ref, o_ref, *, eps):
    """out = LayerNorm(x @ W + b); per-row stats via vector reduce (no MXU)."""
    y = jnp.dot(x_ref[...].astype(jnp.bfloat16), w_ref[...],
                preferred_element_type=jnp.float32) + b_ref[...]
    m = jnp.mean(y, axis=-1, keepdims=True)
    c = y - m
    var = jnp.mean(c * c, axis=-1, keepdims=True)
    o_ref[...] = c * lax.rsqrt(var + eps) * g_ref[...] + beta_ref[...]


def _linear_groupnorm_kernel(x_ref, w_ref, b_ref, g_ref, beta_ref, a_ref, o_ref,
                             *, eps):
    """Grouped variant: `group` tokens packed side-by-side along lanes
    (block-diagonal weight); per-segment LN stats via the segment-averaging
    matrix A (two extra MXU passes, only used for the tiny head)."""
    y = jnp.dot(x_ref[...].astype(jnp.bfloat16), w_ref[...],
                preferred_element_type=jnp.float32) + b_ref[...]
    mean = jnp.dot(y, a_ref[...], preferred_element_type=jnp.float32)
    c = y - mean
    var = jnp.dot(c * c, a_ref[...], preferred_element_type=jnp.float32)
    o_ref[...] = c * lax.rsqrt(var + eps) * g_ref[...] + beta_ref[...]


def fused_linear_layernorm(x, w, b, gamma, beta, *, eps=1e-5, group=1,
                           row_tile=512):
    """out[n] = LayerNorm(x[n] @ w + b) * gamma + beta.

    group > 1 packs `group` consecutive rows into one kernel row so the store
    width becomes group*d_out lanes (lane-dense for small d_out)."""
    n, d_in = x.shape
    d_out = w.shape[1]

    if group > 1:
        # Bounded tradeoff: kron weight is group-x redundant MXU work + two
        # A-matmuls; only worth it for a tiny head where stores dominate.
        assert n % group == 0, (n, group)
        ng = n // group
        dg_in, dg_out = group * d_in, group * d_out
        xg = x.reshape(ng, dg_in)
        wg = jnp.kron(jnp.eye(group, dtype=w.dtype), w)              # (dg_in, dg_out)
        bg = jnp.tile(b.reshape(1, d_out), (1, group))
        gg = jnp.tile(gamma.reshape(1, d_out), (1, group))
        betg = jnp.tile(beta.reshape(1, d_out), (1, group))
        seg = jnp.arange(dg_out) // d_out
        a = (seg[:, None] == seg[None, :]).astype(jnp.float32) / d_out

        rt = min(row_tile, ng)
        out = pl.pallas_call(
            functools.partial(_linear_groupnorm_kernel, eps=eps),
            out_shape=jax.ShapeDtypeStruct((ng, dg_out), jnp.float32),
            grid=(pl.cdiv(ng, rt),),
            in_specs=[
                pl.BlockSpec((rt, dg_in), lambda i: (i, 0)),
                pl.BlockSpec((dg_in, dg_out), lambda i: (0, 0)),
                pl.BlockSpec((1, dg_out), lambda i: (0, 0)),
                pl.BlockSpec((1, dg_out), lambda i: (0, 0)),
                pl.BlockSpec((1, dg_out), lambda i: (0, 0)),
                pl.BlockSpec((dg_out, dg_out), lambda i: (0, 0)),
            ],
            out_specs=pl.BlockSpec((rt, dg_out), lambda i: (i, 0)),
            compiler_params=pltpu.CompilerParams(
                dimension_semantics=("parallel",),
                vmem_limit_bytes=VMEM_LIMIT_BYTES),
        )(xg, wg, bg, gg, betg, a)
        return out.reshape(n, d_out)

    rt = min(row_tile, n)
    return pl.pallas_call(
        functools.partial(_linear_layernorm_kernel, eps=eps),
        out_shape=jax.ShapeDtypeStruct((n, d_out), jnp.float32),
        grid=(pl.cdiv(n, rt),),
        in_specs=[
            pl.BlockSpec((rt, d_in), lambda i: (i, 0)),
            pl.BlockSpec((d_in, d_out), lambda i: (0, 0)),
            pl.BlockSpec((1, d_out), lambda i: (0, 0)),
            pl.BlockSpec((1, d_out), lambda i: (0, 0)),
            pl.BlockSpec((1, d_out), lambda i: (0, 0)),
        ],
        out_specs=pl.BlockSpec((rt, d_out), lambda i: (i, 0)),
        compiler_params=pltpu.CompilerParams(
            dimension_semantics=("parallel",),
            vmem_limit_bytes=VMEM_LIMIT_BYTES),
    )(x, w, b.reshape(1, d_out), gamma.reshape(1, d_out), beta.reshape(1, d_out))


# ----------------------------------------------------------------------------
# Whole transformer stack in one pallas_call.
# grid = (batch_block, layer): batch blocks "parallel", layers "arbitrary".
# The residual stream for the current batch block lives in the OUTPUT block's
# VMEM buffer across all layers (same block index for every layer); per-layer
# weights stream via BlockSpec (double-buffered).
# ----------------------------------------------------------------------------
def _decoder_stack_kernel(x_ref, pos_ref, ln1g, ln1b, wq, bq, wk, bk, wv, bv,
                          wp, bp, ln2g, ln2b, w1, b1, w2, b2, o_ref,
                          *, seq_len, eps):
    S = seq_len
    N, D = o_ref.shape                    # N = Bb * S flattened token rows
    Bb = N // S
    H = wq.shape[1]
    hd = wq.shape[3]
    scale = 1.0 / math.sqrt(hd)

    # First layer: initialize the resident residual from the input block and
    # fuse the positional-embedding add.
    @pl.when(pl.program_id(1) == 0)
    def _():
        o_ref[...] = x_ref[...] + pos_ref[...]

    x = o_ref[...]                        # (N, D) f32 residual

    def layer_norm(v, g_r, b_r):          # f32 statistics (vector reduce)
        m = jnp.mean(v, axis=-1, keepdims=True)
        c = v - m
        var = jnp.mean(c * c, axis=-1, keepdims=True)
        return c * lax.rsqrt(var + eps) * g_r[0] + b_r[0]

    # ---- multi-head self-attention ------------------------------------------
    # q/k/v projections: head-batched einsums on ALL Bb*S rows at once
    # (M = Bb*S per MXU pass), contracting over the full model dim D and
    # producing true per-head (H, N, hd) tensors -- no mask trick, no H-times
    # redundant FLOPs, no unaligned lane slices of a fused qkv tensor.
    hn = layer_norm(x, ln1g, ln1b).astype(jnp.bfloat16)
    hb = jnp.broadcast_to(hn[None], (H, N, D))
    q3 = jnp.einsum('hnd,hde->hne', hb, wq[0],
                    preferred_element_type=jnp.float32) + bq[0]        # (H, N, hd)
    k3 = jnp.einsum('hnd,hde->hne', hb, wk[0],
                    preferred_element_type=jnp.float32) + bk[0]
    v3 = jnp.einsum('hnd,hde->hne', hb, wv[0],
                    preferred_element_type=jnp.float32) + bv[0]

    # Scores / context are per-sequence: small static loop over the Bb
    # sequences of this batch block, each contracting over hd per head.
    for b in range(Bb):
        lo = b * S
        qb = q3[:, lo:lo + S, :].astype(jnp.bfloat16)                  # (H, S, hd)
        kb = k3[:, lo:lo + S, :].astype(jnp.bfloat16)
        vb = v3[:, lo:lo + S, :].astype(jnp.bfloat16)
        s = jnp.einsum('hqd,hkd->hqk', qb, kb,
                       preferred_element_type=jnp.float32) * scale     # (H, S, S)
        s = s - jnp.max(s, axis=-1, keepdims=True)
        e = jnp.exp(s)
        p = e / jnp.sum(e, axis=-1, keepdims=True)                     # exact softmax
        ob = jnp.einsum('hqk,hkd->hqd', p.astype(jnp.bfloat16), vb,
                        preferred_element_type=jnp.float32)            # (H, S, hd)
        # output projection folded per head ((H,hd,D) weights) + head sum:
        # identical math to concat(heads) @ Wproj, no lane concatenation.
        pb = jnp.einsum('hqe,hed->hqd', ob.astype(jnp.bfloat16), wp[0],
                        preferred_element_type=jnp.float32)            # (H, S, D)
        attn_b = jnp.sum(pb, axis=0) + bp[0]                           # (S, D)
        # residual add written straight into the resident output block
        o_ref[pl.ds(lo, S), :] = o_ref[pl.ds(lo, S), :] + attn_b

    x = o_ref[...]                        # residual after attention (N, D)

    # ---- MLP (flattened Bb*S rows -> full MXU row fill) ----------------------
    h2 = layer_norm(x, ln2g, ln2b).astype(jnp.bfloat16)
    hid = jnp.dot(h2, w1[0], preferred_element_type=jnp.float32) + b1[0]
    # TODO(synk): PyTorch nn.GELU defaults to exact erf; tanh approximation used
    # because Mosaic has no erf primitive.
    hid = jax.nn.gelu(hid, approximate=True)
    mlp = jnp.dot(hid.astype(jnp.bfloat16), w2[0],
                  preferred_element_type=jnp.float32) + b2[0]
    o_ref[...] = x + mlp


def _pick_batch_block(batch, seq):
    """Largest divisor of `batch` giving ~256 flattened rows per grid step and a
    sublane-friendly block (Bb*S % 8 == 0, or the full array)."""
    target = max(1, -(-256 // seq))
    best = batch                                     # full batch is always valid
    for bb in range(min(batch, target), 0, -1):
        if batch % bb == 0 and (bb == batch or (bb * seq) % 8 == 0):
            best = bb
            break
    return best


def transformer_stack(x, pos, stacked, *, eps=1e-5):
    """x: (B, S, D) float32; pos: (S, D); stacked: per-layer weights."""
    B, S, D = x.shape
    L, H = stacked["wq"].shape[0], stacked["wq"].shape[1]
    hd = stacked["wq"].shape[3]
    Dh = stacked["w1"].shape[2]

    Bb = _pick_batch_block(B, S)
    nb = B // Bb
    N = Bb * S

    xf = x.reshape(B * S, D)
    pos_tiled = jnp.tile(pos, (Bb, 1))               # (Bb*S, D), same for all blocks

    def wspec(shape):
        zeros = (0,) * len(shape)
        return pl.BlockSpec((1,) + shape, lambda i, l, z=zeros: (l,) + z)

    # NOTE: with nb == 1 every layer weight is streamed exactly once; for larger
    # batches the Bb-blocking divides weight HBM traffic by Bb.  If profiling
    # shows exposed weight DMA, pl.Buffered(3) on wq/wk/wv/w1/w2 is the next lever
    # (within the v7x VMEM budget).
    out = pl.pallas_call(
        functools.partial(_decoder_stack_kernel, seq_len=S, eps=eps),
        out_shape=jax.ShapeDtypeStruct((B * S, D), jnp.float32),
        grid=(nb, L),
        in_specs=[
            pl.BlockSpec((N, D), lambda i, l: (i, 0)),     # residual input
            pl.BlockSpec((N, D), lambda i, l: (0, 0)),     # pos embedding (tiled)
            wspec((1, D)), wspec((1, D)),                  # ln1 gamma/beta
            wspec((H, D, hd)), wspec((H, 1, hd)),          # wq, bq
            wspec((H, D, hd)), wspec((H, 1, hd)),          # wk, bk
            wspec((H, D, hd)), wspec((H, 1, hd)),          # wv, bv
            wspec((H, hd, D)), wspec((1, D)),              # attn out-proj
            wspec((1, D)), wspec((1, D)),                  # ln2 gamma/beta
            wspec((D, Dh)), wspec((1, Dh)),                # mlp fc1
            wspec((Dh, D)), wspec((1, D)),                 # mlp fc2
        ],
        # same block index for every layer -> output stays resident in VMEM and
        # doubles as the residual accumulator (no scratch, no final copy).
        out_specs=pl.BlockSpec((N, D), lambda i, l: (i, 0)),
        compiler_params=pltpu.CompilerParams(
            dimension_semantics=("parallel", "arbitrary"),
            vmem_limit_bytes=VMEM_LIMIT_BYTES),
    )(xf, pos_tiled,
      stacked["ln1_g"], stacked["ln1_b"],
      stacked["wq"], stacked["bq"], stacked["wk"], stacked["bk"],
      stacked["wv"], stacked["bv"], stacked["wproj"], stacked["bproj"],
      stacked["ln2_g"], stacked["ln2_b"],
      stacked["w1"], stacked["b1"], stacked["w2"], stacked["b2"])
    return out.reshape(B, S, D)


# ----------------------------------------------------------------------------
# Parameter init (deterministic, synthetic -- mirrors the module's shapes).
# Matmul weights stored bf16 (per-head split done host-side); biases / LN
# params / embeddings f32.
# ----------------------------------------------------------------------------
def init_params(key, *, enc_dim, emb_dim, num_layer, num_head, num_patches,
                out_dim, mlp_ratio=4):
    T = math.prod(num_patches)
    hidden = emb_dim * mlp_ratio
    hd = emb_dim // num_head
    keys = iter(jax.random.split(key, 16))

    def w_init(d_in, d_out, prefix=()):
        w = jax.random.normal(next(keys), prefix + (d_in, d_out),
                              jnp.float32) / math.sqrt(d_in)
        return w.astype(jnp.bfloat16)

    def split_out_heads(w):     # (L, D, D) -> (L, H, D, hd); out col = h*hd + e
        L = w.shape[0]
        return w.reshape(L, emb_dim, num_head, hd).transpose(0, 2, 1, 3)

    p = {}
    p["proj_w"] = w_init(enc_dim, emb_dim)
    p["proj_b"] = jnp.zeros((emb_dim,), jnp.float32)
    p["proj_ln_g"] = jnp.ones((emb_dim,), jnp.float32)
    p["proj_ln_b"] = jnp.zeros((emb_dim,), jnp.float32)
    p["mask_token"] = 0.02 * jax.random.normal(next(keys), (1, 1, emb_dim),
                                               jnp.float32)
    p["pos_embedding"] = 0.02 * jax.random.normal(next(keys),
                                                  (T + 1, 1, emb_dim),
                                                  jnp.float32)

    wq_full = w_init(emb_dim, emb_dim, (num_layer,))
    wk_full = w_init(emb_dim, emb_dim, (num_layer,))
    wv_full = w_init(emb_dim, emb_dim, (num_layer,))
    wp_full = w_init(emb_dim, emb_dim, (num_layer,))

    p["stack"] = {
        "ln1_g": jnp.ones((num_layer, 1, emb_dim), jnp.float32),
        "ln1_b": jnp.zeros((num_layer, 1, emb_dim), jnp.float32),
        "ln2_g": jnp.ones((num_layer, 1, emb_dim), jnp.float32),
        "ln2_b": jnp.zeros((num_layer, 1, emb_dim), jnp.float32),
        "wq": split_out_heads(wq_full),
        "wk": split_out_heads(wk_full),
        "wv": split_out_heads(wv_full),
        "bq": jnp.zeros((num_layer, num_head, 1, hd), jnp.float32),
        "bk": jnp.zeros((num_layer, num_head, 1, hd), jnp.float32),
        "bv": jnp.zeros((num_layer, num_head, 1, hd), jnp.float32),
        # out-proj rows are head-major (h*hd + e) -> reshape to (L, H, hd, D)
        "wproj": wp_full.reshape(num_layer, num_head, hd, emb_dim),
        "bproj": jnp.zeros((num_layer, 1, emb_dim), jnp.float32),
        "w1": w_init(emb_dim, hidden, (num_layer,)),
        "b1": jnp.zeros((num_layer, 1, hidden), jnp.float32),
        "w2": w_init(hidden, emb_dim, (num_layer,)),
        "b2": jnp.zeros((num_layer, 1, emb_dim), jnp.float32),
    }

    p["head_w"] = w_init(emb_dim, out_dim)
    p["head_b"] = jnp.zeros((out_dim,), jnp.float32)
    p["head_ln_g"] = jnp.ones((out_dim,), jnp.float32)
    p["head_ln_b"] = jnp.zeros((out_dim,), jnp.float32)
    return p


# ----------------------------------------------------------------------------
# MAE_Decoder.forward
# ----------------------------------------------------------------------------
def mae_decoder_forward(features, forward_indexes, backward_indexes, params, *,
                        num_patches, base_patch_size):
    del forward_indexes  # unused in forward (same as the PyTorch module)
    S_vis, B, enc_dim = features.shape
    emb_dim = params["proj_w"].shape[1]
    out_dim = params["head_w"].shape[1]

    # projection + projection_norm (fused, row-tiled Pallas kernel)
    x = fused_linear_layernorm(features.reshape(S_vis * B, enc_dim),
                               params["proj_w"], params["proj_b"],
                               params["proj_ln_g"], params["proj_ln_b"])
    x = x.reshape(S_vis, B, emb_dim)

    # backward_indexes = cat([zeros, backward_indexes + 1])
    bidx = jnp.concatenate(
        [jnp.zeros((1, B), backward_indexes.dtype), backward_indexes + 1],
        axis=0)                                                       # (T+1, B)
    Tp1 = bidx.shape[0]

    # TODO(synk): the mask-token concat + backward_indexes gather still run as
    # XLA ops between the two Pallas calls; fusing them needs a scalar-prefetch
    # row-gather index_map on the stack input.
    x_btc = jnp.transpose(x, (1, 0, 2))                               # (B, S_vis, E)
    mask = jnp.broadcast_to(params["mask_token"].reshape(1, 1, emb_dim),
                            (B, Tp1 - S_vis, emb_dim))
    feats = jnp.concatenate([x_btc, mask], axis=1)                    # (B, T+1, E)
    feats = jnp.take_along_axis(feats, bidx.T[:, :, None], axis=1)    # un-shuffle

    # transformer (pos-embedding add fused into the first layer of the stack)
    pos = params["pos_embedding"].reshape(Tp1, emb_dim)
    feats = transformer_stack(feats, pos, params["stack"])

    # drop cls token; head + head_norm (lane-dense grouped output if cheap)
    feats = feats[:, 1:, :]                                           # (B, T, E)
    T = feats.shape[1]
    head_group = 1
    if (out_dim < 128 and 128 % out_dim == 0
            and (B * T) % (128 // out_dim) == 0
            and emb_dim * (128 // out_dim) <= 2048):
        head_group = 128 // out_dim
    patches = fused_linear_layernorm(feats.reshape(B * T, emb_dim),
                                     params["head_w"], params["head_b"],
                                     params["head_ln_g"], params["head_ln_b"],
                                     group=head_group)
    patches = patches.reshape(B, T, out_dim)

    # patch2img: '(nz ny nx) b (c pz py px) -> b c (nz pz) (ny py) (nx px)', c=1
    nz, ny, nx = num_patches
    pz, py, px = base_patch_size
    img = patches.reshape(B, nz, ny, nx, 1, pz, py, px)
    img = jnp.transpose(img, (0, 4, 1, 5, 2, 6, 3, 7))
    img = img.reshape(B, 1, nz * pz, ny * py, nx * px)
    return img


if __name__ == "__main__":
    # small config consistent with the module
    num_patches = [2, 2, 2]        # T = 8 patches
    base_patch_size = [2, 4, 4]    # out_dim = 32
    enc_dim, emb_dim = 64, 48
    num_layer, num_head = 2, 3
    B = 2
    n_visible = 4                  # visible patches kept by the encoder
    S_vis = n_visible + 1          # + cls token

    T = math.prod(num_patches)
    out_dim = math.prod(base_patch_size)

    key = jax.random.PRNGKey(0)
    kp, kf, ki = jax.random.split(key, 3)
    params = init_params(kp, enc_dim=enc_dim, emb_dim=emb_dim,
                         num_layer=num_layer, num_head=num_head,
                         num_patches=num_patches, out_dim=out_dim)

    features = jax.random.normal(kf, (S_vis, B, enc_dim), jnp.float32)
    # per-batch permutation of patch indices (as produced by MAE random masking)
    perm = jnp.stack(
        [jax.random.permutation(jax.random.fold_in(ki, b), T) for b in range(B)],
        axis=1)
    forward_indexes = perm.astype(jnp.int32)                                    # (T, B)
    backward_indexes = jnp.stack(
        [jnp.argsort(perm[:, b]) for b in range(B)], axis=1).astype(jnp.int32)  # (T, B)

    img = mae_decoder_forward(features, forward_indexes, backward_indexes,
                              params, num_patches=num_patches,
                              base_patch_size=base_patch_size)
    img = jax.block_until_ready(img)
    assert img.shape == (B, 1,
                         num_patches[0] * base_patch_size[0],
                         num_patches[1] * base_patch_size[1],
                         num_patches[2] * base_patch_size[2]), img.shape
    assert bool(jnp.all(jnp.isfinite(img)))
    print("KERNEL_OK")
</pallas_src>

<mosaic_0001>
module attributes {stable_mosaic.version = 11 : i64} {
  func.func @_linear_layernorm_kernel(%arg0: i32, %arg1: memref<10x64xf32, #tpu.memory_space<vmem>>, %arg2: memref<64x48xbf16, #tpu.memory_space<vmem>>, %arg3: memref<1x48xf32, #tpu.memory_space<vmem>>, %arg4: memref<1x48xf32, #tpu.memory_space<vmem>>, %arg5: memref<1x48xf32, #tpu.memory_space<vmem>>, %arg6: memref<10x48xf32, #tpu.memory_space<vmem>>) attributes {dimension_semantics = [#tpu.dimension_semantics<parallel>], iteration_bounds = array<i64: 1>, scalar_prefetch = 0 : i64, scratch_operands = 0 : i64, tpu.core_type = #tpu.core_type<tc>, window_params = [{transform_indices = @transform_0, window_bounds = array<i64: 10, 64>}, {pipeline_mode = #tpu.pipeline_mode<synchronous>, transform_indices = @transform_1, window_bounds = array<i64: 64, 48>}, {pipeline_mode = #tpu.pipeline_mode<synchronous>, transform_indices = @transform_2, window_bounds = array<i64: 1, 48>}, {pipeline_mode = #tpu.pipeline_mode<synchronous>, transform_indices = @transform_3, window_bounds = array<i64: 1, 48>}, {pipeline_mode = #tpu.pipeline_mode<synchronous>, transform_indices = @transform_4, window_bounds = array<i64: 1, 48>}, {transform_indices = @transform_5, window_bounds = array<i64: 10, 48>}]} {
    %c0 = arith.constant 0 : index
    %c0_0 = arith.constant 0 : index
    %0 = vector.load %arg1[%c0, %c0_0] : memref<10x64xf32, #tpu.memory_space<vmem>>, vector<10x64xf32>
    %1 = arith.truncf %0 : vector<10x64xf32> to vector<10x64xbf16>
    %c0_1 = arith.constant 0 : index
    %c0_2 = arith.constant 0 : index
    %2 = vector.load %arg2[%c0_1, %c0_2] : memref<64x48xbf16, #tpu.memory_space<vmem>>, vector<64x48xbf16>
    %cst = arith.constant dense<0.000000e+00> : vector<10x48xf32>
    %3 = tpu.matmul %1, %2, %cst {dimension_numbers = #tpu.dot_dimension_numbers<[1], [0], [0], [1], [0, 0, 1, 1], [], []>} : vector<10x64xbf16>, vector<64x48xbf16>, vector<10x48xf32> -> vector<10x48xf32>
    %c0_3 = arith.constant 0 : index
    %c0_4 = arith.constant 0 : index
    %4 = vector.load %arg3[%c0_3, %c0_4] : memref<1x48xf32, #tpu.memory_space<vmem>>, vector<1x48xf32>
    %5 = vector.broadcast %4 : vector<1x48xf32> to vector<10x48xf32>
    %6 = arith.addf %3, %5 : vector<10x48xf32>
    %cst_5 = arith.constant dense<0.000000e+00> : vector<10xf32>
    %7 = vector.multi_reduction <add>, %6, %cst_5 [1] : vector<10x48xf32> to vector<10xf32>
    %8 = vector.shape_cast %7 : vector<10xf32> to vector<10x1xf32>
    %cst_6 = arith.constant 4.800000e+01 : f32
    %9 = vector.broadcast %cst_6 : f32 to vector<10x1xf32>
    %10 = arith.divf %8, %9 : vector<10x1xf32>
    %11 = vector.broadcast %10 : vector<10x1xf32> to vector<10x48xf32>
    %12 = arith.subf %6, %11 : vector<10x48xf32>
    %13 = arith.mulf %12, %12 : vector<10x48xf32>
    %cst_7 = arith.constant dense<0.000000e+00> : vector<10xf32>
    %14 = vector.multi_reduction <add>, %13, %cst_7 [1] : vector<10x48xf32> to vector<10xf32>
    %15 = vector.shape_cast %14 : vector<10xf32> to vector<10x1xf32>
    %cst_8 = arith.constant 4.800000e+01 : f32
    %16 = vector.broadcast %cst_8 : f32 to vector<10x1xf32>
    %17 = arith.divf %15, %16 : vector<10x1xf32>
    %cst_9 = arith.constant 9.99999974E-6 : f32
    %18 = vector.broadcast %cst_9 : f32 to vector<10x1xf32>
    %19 = arith.addf %17, %18 : vector<10x1xf32>
    %20 = math.rsqrt %19 : vector<10x1xf32>
    %21 = vector.broadcast %20 : vector<10x1xf32> to vector<10x48xf32>
    %22 = arith.mulf %12, %21 : vector<10x48xf32>
    %c0_10 = arith.constant 0 : index
    %c0_11 = arith.constant 0 : index
    %23 = vector.load %arg4[%c0_10, %c0_11] : memref<1x48xf32, #tpu.memory_space<vmem>>, vector<1x48xf32>
    %24 = vector.broadcast %23 : vector<1x48xf32> to vector<10x48xf32>
    %25 = arith.mulf %22, %24 : vector<10x48xf32>
    %c0_12 = arith.constant 0 : index
    %c0_13 = arith.constant 0 : index
    %26 = vector.load %arg5[%c0_12, %c0_13] : memref<1x48xf32, #tpu.memory_space<vmem>>, vector<1x48xf32>
    %27 = vector.broadcast %26 : vector<1x48xf32> to vector<10x48xf32>
    %28 = arith.addf %25, %27 : vector<10x48xf32>
    %c0_14 = arith.constant 0 : index
    %c0_15 = arith.constant 0 : index
    %29 = vector.load %arg6[%c0_14, %c0_15] : memref<10x48xf32, #tpu.memory_space<vmem>>, vector<10x48xf32>
    tpu.vector_store %arg6[%c0_14, %c0_15], %28 {strides = array<i32>} : memref<10x48xf32, #tpu.memory_space<vmem>>, vector<10x48xf32>,
    return
  }
  func.func @transform_0(%arg0: i32) -> (i32, i32) {
    %c0_i32 = arith.constant 0 : i32
    %c0_i32_0 = arith.constant 0 : i32
    return %arg0, %c0_i32 : i32, i32
  }
  func.func @transform_1(%arg0: i32) -> (i32, i32) {
    %c0_i32 = arith.constant 0 : i32
    %c0_i32_0 = arith.constant 0 : i32
    %c0_i32_1 = arith.constant 0 : i32
    return %c0_i32, %c0_i32_0 : i32, i32
  }
  func.func @transform_2(%arg0: i32) -> (i32, i32) {
    %c0_i32 = arith.constant 0 : i32
    %c0_i32_0 = arith.constant 0 : i32
    %c0_i32_1 = arith.constant 0 : i32
    return %c0_i32, %c0_i32_0 : i32, i32
  }
  func.func @transform_3(%arg0: i32) -> (i32, i32) {
    %c0_i32 = arith.constant 0 : i32
    %c0_i32_0 = arith.constant 0 : i32
    %c0_i32_1 = arith.constant 0 : i32
    return %c0_i32, %c0_i32_0 : i32, i32
  }
  func.func @transform_4(%arg0: i32) -> (i32, i32) {
    %c0_i32 = arith.constant 0 : i32
    %c0_i32_0 = arith.constant 0 : i32
    %c0_i32_1 = arith.constant 0 : i32
    return %c0_i32, %c0_i32_0 : i32, i32
  }
  func.func @transform_5(%arg0: i32) -> (i32, i32) {
    %c0_i32 = arith.constant 0 : i32
    %c0_i32_0 = arith.constant 0 : i32
    return %arg0, %c0_i32 : i32, i32
  }
}

</mosaic_0001>

<llo_original>
// kernel: tpu_custom_call.1
$region0: #{tpu_custom_call.1}
  #allocation0 [shape = 'u32[]', space=smem, size = 0x4, offset = 0x4, fixed_abs, tag = 'smem constant byte address 0x4 - core index']
  #allocation1 [shape = 'u32[144,128]{1,0:T(1,128)}', space=vmem, size = 0x12000, scoped, tag = 'internal scratch']
  %s0 = inlined_call_operand.vmem [shape: f32[10,64], index: 0, kind: input, shape index: {}]
  %s1 = inlined_call_operand.vmem [shape: bf16[64,48], index: 1, kind: input, shape index: {}]
  %s2 = inlined_call_operand.vmem [shape: f32[1,48], index: 2, kind: input, shape index: {}]
  %s3 = inlined_call_operand.vmem [shape: f32[1,48], index: 3, kind: input, shape index: {}]
  %s4 = inlined_call_operand.vmem [shape: f32[1,48], index: 4, kind: input, shape index: {}]
  %s5 = inlined_call_operand.hbm [shape: f32[10,48], index: 5, kind: output, shape index: {}]
  %s6 = sld [smem:[#allocation0]]
  $region30: #{tpu_custom_call.1} parent=0
    _
  %s8 = ssub.s32 1, %s6
  %s9 = scalar_select 0, %s8, %s6
  $region1: #{tpu_custom_call.1} parent=0
    #allocation2 [shape = 'u8[8192]{0}', space=vmem, size = 0x2000, scoped, tag = 'output window, operand 0, single buffered']
    #allocation3 [shape = 's32[1]{0}', space=sflag, size = 0x4, scoped, tag = 'scoped memory for tpu_custom_call.1']
    %10 = vsyncpa [#allocation3], 0
    // Predicated region
    $region2: #{tpu_custom_call.1} parent=1 // pred_check
      _
    $region3: #{tpu_custom_call.1} parent=1 // pred_check_branch
      %12 = sbr.rel (0) target = $region5
    $region4: #{tpu_custom_call.1} parent=1 // pred_region
      _
    $region5: #{tpu_custom_call.1} parent=1 // pred_fallthru
      _
    // Predicated region
    $region6: #{tpu_custom_call.1} parent=1 // pred_check
      _
    $region7: #{tpu_custom_call.1} parent=1 // pred_check_branch
      %14 = sbr.rel (0) target = $region9
    $region8: #{tpu_custom_call.1} parent=1 // pred_region
      _
    $region9: #{tpu_custom_call.1} parent=1 // pred_fallthru
      _
    // Predicated region
    $region10: #{tpu_custom_call.1} parent=1 // pred_check
      _
    $region11: #{tpu_custom_call.1} parent=1 // pred_check_branch
      %16 = sbr.rel (0) target = $region13
    $region12: #{tpu_custom_call.1} parent=1 // pred_region
      _
    $region13: #{tpu_custom_call.1} parent=1 // pred_fallthru
      _
    // Predicated region
    $region14: #{tpu_custom_call.1} parent=1 // pred_check
      _
    $region15: #{tpu_custom_call.1} parent=1 // pred_check_branch
      %18 = sbr.rel (0) target = $region17
    $region16: #{tpu_custom_call.1} parent=1 // pred_region
      _
    $region17: #{tpu_custom_call.1} parent=1 // pred_fallthru
      _
    // Predicated region
    $region18: #{tpu_custom_call.1} parent=1 // pred_check
      _
    $region19: #{tpu_custom_call.1} parent=1 // pred_check_branch
      %20 = sbr.rel (0) target = $region21
    $region20: #{tpu_custom_call.1} parent=1 // pred_region
      _
    $region21: #{tpu_custom_call.1} parent=1 // pred_fallthru
      _
    %v22 = vld [vmem:[%s0] sm:$0xff]
    %v23 = vld [vmem:[%s0 + $0x8] sm:$0x3]
    %v24 = vpack.c.bf16 %v23, %v22
    %v25 = vld [vmem:[%s1] sm:$0xf]
    %v26 = vld [vmem:[%s1 + $0x4] sm:$0xf]
    %v27 = vld [vmem:[%s1 + $0x8] sm:$0xf]
    %v28 = vld [vmem:[%s1 + $0xc] sm:$0xf]
    %v29 = vld [vmem:[%s1 + $0x10] sm:$0xf]
    %v30 = vld [vmem:[%s1 + $0x14] sm:$0xf]
    %v31 = vld [vmem:[%s1 + $0x18] sm:$0xf]
    %v32 = vld [vmem:[%s1 + $0x1c] sm:$0xf]
    %v33 = vld [vmem:[%s2] sm:$0x1]
    %v35 = vlaneseq
    %v36 = vshrl.u32 %v35, 7
    %v37 = vsub.s32 0, %v36
    %v38 = vrot.slane %v33, %v37
    %v48 = vunpack.c.l.b16 %v25
    %v49 = vunpack.c.l.b16 %v26
    %v50 = vunpack.c.l.b16 %v27
    %v51 = vunpack.c.l.b16 %v28
    %v52 = vunpack.c.l.b16 %v29
    %v53 = vunpack.c.l.b16 %v30
    %v54 = vunpack.c.l.b16 %v31
    %v55 = vunpack.c.l.b16 %v32
    %v56 = vpack.c.b16 %v49, %v48
    %v57 = vpack.c.b16 %v51, %v50
    %v58 = vpack.c.b16 %v53, %v52
    %v59 = vpack.c.b16 %v55, %v54
    %vm64 = vcmask 523264
    %v66 = vsel %vm64, %v24, 0
    %68 = vmatprep.subr.bf16.mxu0 0
    %69 = vmatpush1.bf16.msra.mxu0 %v56
    %70 = vmatprep.subr.bf16.mxu0 0
    %71 = vmatpush1.bf16.msra.mxu0 %v57
    %72 = vmatprep.subr.bf16.mxu0 0
    %73 = vmatpush1.bf16.msra.mxu0 %v58
    %74 = vmatprep.subr.bf16.mxu0 0
    %75 = vmatpush1.bf16.msra.mxu0 %v59
    %76 = vmatprep.subr.bf16.mxu0 0
    %77 = vmatpush1.bf16.msra.mxu0 0
    %78 = vmatprep.subr.bf16.mxu0 0
    %79 = vmatpush1.bf16.msra.mxu0 0
    %80 = vmatprep.subr.bf16.mxu0 0
    %81 = vmatpush1.bf16.msra.mxu0 0
    %82 = vmatprep.subr.bf16.mxu0 0
    %83 = vmatpush1.bf16.msra.mxu0 0
    %84 = vmatprep.subr.bf16.mxu0 0
    %85 = vmatpush1.bf16.msra.mxu0 0
    %86 = vmatprep.subr.bf16.mxu0 0
    %87 = vmatpush1.bf16.msra.mxu0 0
    %88 = vmatprep.subr.bf16.mxu0 0
    %89 = vmatpush1.bf16.msra.mxu0 0
    %90 = vmatprep.subr.bf16.mxu0 0
    %91 = vmatpush1.bf16.msra.mxu0 0
    %92 = vmatprep.subr.bf16.mxu0 0
    %93 = vmatpush1.bf16.msra.mxu0 0
    %94 = vmatprep.subr.bf16.mxu0 0
    %95 = vmatpush1.bf16.msra.mxu0 0
    %96 = vmatprep.subr.bf16.mxu0 0
    %97 = vmatpush1.bf16.msra.mxu0 0
    %98 = vmatprep.subr.bf16.mxu0 0
    %99 = vmatpush1.bf16.msra.mxu0 0
    %100 = vmatprep.mubr.bf16.mxu0 0
    %101 = vmatmul.mubr.bf16.gmra.mrb[0].mxu0 %v66
    %v102 = vpop.f32.mrb[0].mxu0
    %v103 = vadd.f32 %v38, %v102
    %v104 = vpop.f32.mrb[0].mxu0
    %v105 = vpop.f32.mrb[0].mxu0
    %v106 = vadd.f32 %v38, %v105
    %v107 = vpop.f32.mrb[0].mxu0
    %108 = vdwg.mxu0
    %vm109 = vcmask 392192
    %v110 = vsel %vm109, %v103, 0.0
    %111 = vadd.xlane.f32.xlu0 %v110
    %v112 = vpop.xlane.xlu0 %111
    %vm113 = vcmask 386048
    %v114 = vsel %vm113, %v106, 0.0
    %115 = vadd.xlane.f32.xlu0 %v114
    %v116 = vpop.xlane.xlu0 %115
    %v117 = vrcp.pop 48.0
    %v118 = vmul.f32 %v112, %v117
    %v119 = vmul.f32 %v116, %v117
    %v120 = vsub.f32 %v103, %v118
    %v121 = vsub.f32 %v106, %v119
    %v122 = vmul.f32 %v120, %v120
    %v123 = vmul.f32 %v121, %v121
    %v124 = vsel %vm109, %v122, 0.0
    %125 = vadd.xlane.f32.xlu0 %v124
    %v126 = vpop.xlane.xlu0 %125
    %v127 = vsel %vm113, %v123, 0.0
    %128 = vadd.xlane.f32.xlu0 %v127
    %v129 = vpop.xlane.xlu0 %128
    %v130 = vmul.f32 %v126, %v117
    %v131 = vmul.f32 %v129, %v117
    %v132 = vadd.f32 %v130, 1e-05
    %v133 = vadd.f32 %v131, 1e-05
    %v134 = vrsqrt.pop %v132
    %v135 = vrsqrt.pop %v133
    %v136 = vmul.f32 %v120, %v134
    %v137 = vmul.f32 %v121, %v135
    %v138 = vld [vmem:[%s3] sm:$0x1]
    %v140 = vlaneseq
    %v141 = vshrl.u32 %v140, 7
    %v142 = vsub.s32 0, %v141
    %v143 = vrot.slane %v138, %v142
    %v145 = vmul.f32 %v136, %v143
    %v146 = vmul.f32 %v137, %v143
    %v147 = vld [vmem:[%s4] sm:$0x1]
    %v149 = vlaneseq
    %v150 = vshrl.u32 %v149, 7
    %v151 = vsub.s32 0, %v150
    %v152 = vrot.slane %v147, %v151
    %v154 = vadd.f32 %v145, %v152
    %v155 = vadd.f32 %v146, %v152
    %156 = vst.msk [vmem:[#allocation2] sm:$0xff] %vm109, %v154
    %157 = vst.msk [vmem:[#allocation2 + $0x8] sm:$0x3] %vm113, %v155
    // Predicated region
    $region22: #{tpu_custom_call.1} parent=1 // pred_check
      _
    $region23: #{tpu_custom_call.1} parent=1 // pred_check_branch
      %159 = sbr.rel (0) target = $region25
    $region24: #{tpu_custom_call.1} parent=1 // pred_region
      %s161 = ssub.s32 256, 256
      %162 = vsyncadd [#allocation3], %s161
      %s163 = sshll.u32 [#allocation2], 4
      %s164 = int_to_ptr.vmem [resolvable:$true] %s163
      %169 = dma.vmem_to_hbm [thread:$0]  %s164, 256, %s5, [#allocation3], 128, 128, 8
    $region25: #{tpu_custom_call.1} parent=1 // pred_fallthru
      _
    // Predicated region
    $region26: #{tpu_custom_call.1} parent=1 // pred_check
      _
    $region27: #{tpu_custom_call.1} parent=1 // pred_check_branch
      %171 = sbr.rel (0) target = $region29
    $region28: #{tpu_custom_call.1} parent=1 // pred_region
      %172 = dma.done [#allocation3], 256
    $region29: #{tpu_custom_call.1} parent=1 // pred_fallthru
      _
    %173 = vsyncpa [#allocation3], 1

</llo_original>
